<compile_context>
chip_gen: v7x
topology: tpu7x:2x2x1
jax: 0.10.0
libtpu: 0.0.40
codegen_flags: <defaults>
</compile_context>

<pallas_src>
import functools

import jax
import jax.numpy as jnp
from jax import lax
from jax.experimental import pallas as pl
from jax.experimental.pallas import tpu as pltpu


def _round_up(x, m):
    return ((x + m - 1) // m) * m


def _vmem_cap_bytes():
    # v7x has 64 MiB VMEM (vs 128 MiB on v5e/v6e); keep comfortable headroom.
    try:
        return int(0.7 * pltpu.get_tpu_info().vmem_capacity_bytes)
    except Exception:
        return 40 * 2**20


def _merge_ln_fc_kernel(xe_ref, xo_ref, we_ref, wo_ref, b_ref, o_ref, *, eps, inv_c4):
    """LayerNorm(4C, affine folded into W) + bias-free Linear(4C -> 2C).

    xe_ref: even-H-row chunk, channels [x0 | x2]; any leading shape, last dim 2C
    xo_ref: odd-H-row  chunk, channels [x1 | x3]; same leading shape
    we_ref, wo_ref: (2C, 2Cout) bf16, gamma folded in, rows reordered per chunk
    b_ref: (1, 2Cout) f32, folded LayerNorm beta (beta @ W^T)
    o_ref: (M, 2Cout) with M = prod(leading dims of xe/xo)
    """
    c2 = we_ref.shape[0]
    # Leading-dim collapse: a pure relabel (no relayout) because the wrapper
    # guarantees Wh % 8 == 0 on the fused path; a no-op on the fallback path.
    xe = xe_ref[...].reshape(-1, c2).astype(jnp.float32)
    xo = xo_ref[...].reshape(-1, c2).astype(jnp.float32)

    # Single-pass LN statistics over the full 4C = [even 2C | odd 2C] channels.
    s = jnp.sum(xe, axis=-1, keepdims=True) + jnp.sum(xo, axis=-1, keepdims=True)
    ss = (jnp.sum(xe * xe, axis=-1, keepdims=True)
          + jnp.sum(xo * xo, axis=-1, keepdims=True))
    mean = s * inv_c4
    # max(.,0) guards masked/garbage rows of a ragged last block against NaN.
    var = jnp.maximum(ss * inv_c4 - mean * mean, 0.0)
    rstd = lax.rsqrt(var + eps)

    xen = ((xe - mean) * rstd).astype(jnp.bfloat16)
    xon = ((xo - mean) * rstd).astype(jnp.bfloat16)
    acc = jnp.dot(xen, we_ref[...], preferred_element_type=jnp.float32)
    acc = acc + jnp.dot(xon, wo_ref[...], preferred_element_type=jnp.float32)
    o_ref[...] = (acc + b_ref[...]).astype(o_ref.dtype)


def _call_fused(x_r, w_even, w_odd, b_folded, *, eps, out_dtype):
    """Fused-gather path.  x_r: (R, 2, Wh, 2C) f32 with Wh % 8 == 0."""
    R, _, Wh, c2 = x_r.shape
    c2o = w_even.shape[1]
    c4 = 2 * c2

    # Target tokens per grid step: bigger for small C (amortize ~0.35us/step),
    # kept moderate for large C so v7x's 64 MiB VMEM has headroom.
    t_tok = 1024 if c4 <= 1024 else 512
    tm_h = max(1, min(R, t_tok // max(Wh, 1)))
    # Guarantee a few grid steps so the parallel grid feeds both TCs (v7x).
    min_steps = min(4, R)
    while pl.cdiv(R, tm_h) < min_steps and tm_h > 1:
        tm_h = max(1, (tm_h + 1) // 2)
    grid = (pl.cdiv(R, tm_h),)
    m = tm_h * Wh  # tokens per grid step; multiple of 8 since Wh % 8 == 0

    in_bytes = m * c4 * x_r.dtype.itemsize
    out_bytes = m * c2o * jnp.dtype(out_dtype).itemsize
    w_bytes = 2 * c2 * c2o * 2  # two bf16 weight halves
    need = 2 * (in_bytes + out_bytes) + 2 * w_bytes + c2o * 4
    vmem_limit = int(min(_vmem_cap_bytes(), max(32 * 2**20, 2 * need)))

    kern = functools.partial(_merge_ln_fc_kernel, eps=eps, inv_c4=1.0 / c4)
    return pl.pallas_call(
        kern,
        out_shape=jax.ShapeDtypeStruct((R * Wh, c2o), out_dtype),
        grid_spec=pltpu.PrefetchScalarGridSpec(
            num_scalar_prefetch=0,
            grid=grid,
            in_specs=[
                # Same HBM array passed twice; the parity axis is pinned 0 / 1,
                # so the 2x2 gather happens inside the Pallas input DMA.
                pl.BlockSpec((tm_h, 1, Wh, c2), lambda g: (g, 0, 0, 0)),  # [x0|x2]
                pl.BlockSpec((tm_h, 1, Wh, c2), lambda g: (g, 1, 0, 0)),  # [x1|x3]
                pl.BlockSpec((c2, c2o), lambda g: (0, 0)),   # weight: grid-invariant
                pl.BlockSpec((c2, c2o), lambda g: (0, 0)),
                pl.BlockSpec((1, c2o), lambda g: (0, 0)),    # bias: grid-invariant
            ],
            out_specs=pl.BlockSpec((m, c2o), lambda g: (g, 0)),
        ),
        compiler_params=pltpu.CompilerParams(
            dimension_semantics=("parallel",),
            vmem_limit_bytes=vmem_limit,
        ),
    )(x_r, x_r, w_even, w_odd, b_folded)


def _call_unfused(xe, xo, w_even, w_odd, b_folded, *, eps, out_dtype):
    """Fallback path: gather done by XLA, activations arrive as bf16 (N, 2C)."""
    n, c2 = xe.shape
    c2o = w_even.shape[1]
    c4 = 2 * c2

    t_tok = 1024 if c4 <= 1024 else 512
    if n <= t_tok:
        tm = n                      # single/few blocks; full-dim block is always legal
    else:
        tm = _round_up(t_tok, 16)   # bf16 input: sublane multiple of 16
    min_steps = 4 if n >= 64 else 1
    while pl.cdiv(n, tm) < min_steps and tm > 16:
        tm = max(16, _round_up(pl.cdiv(tm, 2), 16))
    grid = (pl.cdiv(n, tm),)

    in_bytes = tm * c4 * xe.dtype.itemsize
    out_bytes = tm * c2o * jnp.dtype(out_dtype).itemsize
    w_bytes = 2 * c2 * c2o * 2
    need = 2 * (in_bytes + out_bytes) + 2 * w_bytes + c2o * 4
    vmem_limit = int(min(_vmem_cap_bytes(), max(32 * 2**20, 2 * need)))

    kern = functools.partial(_merge_ln_fc_kernel, eps=eps, inv_c4=1.0 / c4)
    return pl.pallas_call(
        kern,
        out_shape=jax.ShapeDtypeStruct((n, c2o), out_dtype),
        grid_spec=pltpu.PrefetchScalarGridSpec(
            num_scalar_prefetch=0,
            grid=grid,
            in_specs=[
                pl.BlockSpec((tm, c2), lambda g: (g, 0)),
                pl.BlockSpec((tm, c2), lambda g: (g, 0)),
                pl.BlockSpec((c2, c2o), lambda g: (0, 0)),
                pl.BlockSpec((c2, c2o), lambda g: (0, 0)),
                pl.BlockSpec((1, c2o), lambda g: (0, 0)),
            ],
            out_specs=pl.BlockSpec((tm, c2o), lambda g: (g, 0)),
        ),
        compiler_params=pltpu.CompilerParams(
            dimension_semantics=("parallel",),
            vmem_limit_bytes=vmem_limit,
        ),
    )(xe, xo, w_even, w_odd, b_folded)


def patch_merging_forward(x, H, W, gamma, beta, fc_weight, *, eps=1e-5):
    """Pallas-backed Patch_Merging.forward.

    x:         (B, L, C) with L == H * W
    gamma:     (4C,)   LayerNorm weight
    beta:      (4C,)   LayerNorm bias
    fc_weight: (2C, 4C) torch nn.Linear weight layout (out, in), no bias
    returns:   (B, ceil(H/2)*ceil(W/2), 2C)
    """
    B, L, C = x.shape
    assert L == H * W, "input feature has wrong size"

    xg = x.reshape(B, H, W, C)
    if (H % 2 == 1) or (W % 2 == 1):
        xg = jnp.pad(xg, ((0, 0), (0, H % 2), (0, W % 2), (0, 0)))
    Hp, Wp = xg.shape[1], xg.shape[2]
    Hh, Wh = Hp // 2, Wp // 2
    c2o = 2 * C

    # Fold the LayerNorm affine into the bias-free FC:
    #   LN(x) @ W^T = ((x - mu) * rsqrt(var+eps)) @ (gamma * W^T) + beta @ W^T
    # and reorder the weight rows to match the two chunk layouts:
    #   even H rows carry channels [x0 | x2], odd H rows carry [x1 | x3].
    wt = fc_weight.T.astype(jnp.float32)                      # (4C, 2C)
    w_folded = gamma.astype(jnp.float32)[:, None] * wt        # (4C, 2C)
    b_folded = (beta.astype(jnp.float32) @ wt).reshape(1, c2o)
    w_even = jnp.concatenate([w_folded[0:C], w_folded[2 * C:3 * C]], axis=0).astype(jnp.bfloat16)
    w_odd = jnp.concatenate([w_folded[C:2 * C], w_folded[3 * C:4 * C]], axis=0).astype(jnp.bfloat16)

    # Free reshape: (B, Hp, Wp, C) -> (B*Hh, 2, Wh, 2C).  Row r = (b, i); the
    # size-2 axis is the H-parity; the W-parity is merged into the lane dim.
    x_r = xg.reshape(B * Hh, 2, Wh, 2 * C)

    if Wh > 0 and Wh % 8 == 0:
        # Fast path: gather fused into the Pallas input DMA -> no xcat HBM
        # round trip (reads x once in f32, writes the 2C output once).
        out2d = _call_fused(x_r, w_even, w_odd, b_folded, eps=eps, out_dtype=x.dtype)
    else:
        # TODO(synk): a general-Wh fused gather needs an in-kernel relayout
        # (Wh not a sublane multiple); until then the gather stays in XLA but
        # hands the kernel bf16 activations to halve the extra HBM traffic.
        xe = x_r[:, 0].reshape(B * Hh * Wh, 2 * C).astype(jnp.bfloat16)
        xo = x_r[:, 1].reshape(B * Hh * Wh, 2 * C).astype(jnp.bfloat16)
        out2d = _call_unfused(xe, xo, w_even, w_odd, b_folded, eps=eps, out_dtype=x.dtype)

    return out2d.reshape(B, Hh * Wh, c2o)


if __name__ == "__main__":
    key = jax.random.PRNGKey(0)
    k_x, k_g, k_b, k_w, k_x2 = jax.random.split(key, 5)

    def ref_forward(x, H, W, gamma, beta, w, eps=1e-5):
        B, L, C = x.shape
        xg = x.reshape(B, H, W, C)
        if H % 2 or W % 2:
            xg = jnp.pad(xg, ((0, 0), (0, H % 2), (0, W % 2), (0, 0)))
        x0 = xg[:, 0::2, 0::2, :]
        x1 = xg[:, 1::2, 0::2, :]
        x2 = xg[:, 0::2, 1::2, :]
        x3 = xg[:, 1::2, 1::2, :]
        xc = jnp.concatenate([x0, x1, x2, x3], -1).reshape(B, -1, 4 * C)
        mu = jnp.mean(xc, -1, keepdims=True)
        var = jnp.mean((xc - mu) ** 2, -1, keepdims=True)
        xn = (xc - mu) / jnp.sqrt(var + eps) * gamma + beta
        return jnp.einsum("blk,ok->blo", xn, w)

    # Case 1: even H/W with Wh % 8 == 0 -> fused-gather path.
    B, H, W, dim = 2, 16, 16, 32
    x = jax.random.normal(k_x, (B, H * W, dim), dtype=jnp.float32)
    gamma = 1.0 + 0.01 * jax.random.normal(k_g, (4 * dim,), dtype=jnp.float32)
    beta = 0.01 * jax.random.normal(k_b, (4 * dim,), dtype=jnp.float32)
    fc_w = jax.random.normal(k_w, (2 * dim, 4 * dim), dtype=jnp.float32) * 0.02

    out = patch_merging_forward(x, H, W, gamma, beta, fc_w)
    jax.block_until_ready(out)
    exp = ref_forward(x, H, W, gamma, beta, fc_w)
    assert out.shape == (B, (H // 2) * (W // 2), 2 * dim), out.shape
    err = float(jnp.max(jnp.abs(out - exp)))
    assert jnp.allclose(out, exp, atol=5e-2, rtol=5e-2), err

    # Case 2: odd H/W (exercises the zero-pad) with Wh % 8 != 0 -> fallback path.
    B2, H2, W2, dim2 = 2, 7, 7, 16
    x2 = jax.random.normal(k_x2, (B2, H2 * W2, dim2), dtype=jnp.float32)
    g2 = gamma[: 4 * dim2]
    b2 = beta[: 4 * dim2]
    w2 = fc_w[: 2 * dim2, : 4 * dim2]
    out2 = patch_merging_forward(x2, H2, W2, g2, b2, w2)
    jax.block_until_ready(out2)
    exp2 = ref_forward(x2, H2, W2, g2, b2, w2)
    assert out2.shape == (B2, 4 * 4, 2 * dim2), out2.shape
    err2 = float(jnp.max(jnp.abs(out2 - exp2)))
    assert jnp.allclose(out2, exp2, atol=5e-2, rtol=5e-2), err2

    print("KERNEL_OK")
</pallas_src>

<mosaic_0001>
module attributes {stable_mosaic.version = 11 : i64} {
  func.func @_merge_ln_fc_kernel(%arg0: i32, %arg1: memref<4x1x8x64xf32, #tpu.memory_space<vmem>>, %arg2: memref<4x1x8x64xf32, #tpu.memory_space<vmem>>, %arg3: memref<64x64xbf16, #tpu.memory_space<vmem>>, %arg4: memref<64x64xbf16, #tpu.memory_space<vmem>>, %arg5: memref<1x64xf32, #tpu.memory_space<vmem>>, %arg6: memref<32x64xf32, #tpu.memory_space<vmem>>) attributes {dimension_semantics = [#tpu.dimension_semantics<parallel>], iteration_bounds = array<i64: 4>, scalar_prefetch = 0 : i64, scratch_operands = 0 : i64, tpu.core_type = #tpu.core_type<tc>, window_params = [{transform_indices = @transform_0, window_bounds = array<i64: 4, 1, 8, 64>}, {transform_indices = @transform_1, window_bounds = array<i64: 4, 1, 8, 64>}, {pipeline_mode = #tpu.pipeline_mode<synchronous>, transform_indices = @transform_2, window_bounds = array<i64: 64, 64>}, {pipeline_mode = #tpu.pipeline_mode<synchronous>, transform_indices = @transform_3, window_bounds = array<i64: 64, 64>}, {pipeline_mode = #tpu.pipeline_mode<synchronous>, transform_indices = @transform_4, window_bounds = array<i64: 1, 64>}, {transform_indices = @transform_5, window_bounds = array<i64: 32, 64>}]} {
    %c0 = arith.constant 0 : index
    %c0_0 = arith.constant 0 : index
    %c0_1 = arith.constant 0 : index
    %c0_2 = arith.constant 0 : index
    %0 = vector.load %arg1[%c0, %c0_0, %c0_1, %c0_2] : memref<4x1x8x64xf32, #tpu.memory_space<vmem>>, vector<4x1x8x64xf32>
    %1 = vector.shape_cast %0 : vector<4x1x8x64xf32> to vector<32x64xf32>
    %c0_3 = arith.constant 0 : index
    %c0_4 = arith.constant 0 : index
    %c0_5 = arith.constant 0 : index
    %c0_6 = arith.constant 0 : index
    %2 = vector.load %arg2[%c0_3, %c0_4, %c0_5, %c0_6] : memref<4x1x8x64xf32, #tpu.memory_space<vmem>>, vector<4x1x8x64xf32>
    %3 = vector.shape_cast %2 : vector<4x1x8x64xf32> to vector<32x64xf32>
    %cst = arith.constant dense<0.000000e+00> : vector<32xf32>
    %4 = vector.multi_reduction <add>, %1, %cst [1] : vector<32x64xf32> to vector<32xf32>
    %5 = vector.shape_cast %4 : vector<32xf32> to vector<32x1xf32>
    %cst_7 = arith.constant dense<0.000000e+00> : vector<32xf32>
    %6 = vector.multi_reduction <add>, %3, %cst_7 [1] : vector<32x64xf32> to vector<32xf32>
    %7 = vector.shape_cast %6 : vector<32xf32> to vector<32x1xf32>
    %8 = arith.addf %5, %7 : vector<32x1xf32>
    %9 = arith.mulf %1, %1 : vector<32x64xf32>
    %cst_8 = arith.constant dense<0.000000e+00> : vector<32xf32>
    %10 = vector.multi_reduction <add>, %9, %cst_8 [1] : vector<32x64xf32> to vector<32xf32>
    %11 = vector.shape_cast %10 : vector<32xf32> to vector<32x1xf32>
    %12 = arith.mulf %3, %3 : vector<32x64xf32>
    %cst_9 = arith.constant dense<0.000000e+00> : vector<32xf32>
    %13 = vector.multi_reduction <add>, %12, %cst_9 [1] : vector<32x64xf32> to vector<32xf32>
    %14 = vector.shape_cast %13 : vector<32xf32> to vector<32x1xf32>
    %15 = arith.addf %11, %14 : vector<32x1xf32>
    %cst_10 = arith.constant 7.812500e-03 : f32
    %16 = vector.broadcast %cst_10 : f32 to vector<32x1xf32>
    %17 = arith.mulf %8, %16 : vector<32x1xf32>
    %cst_11 = arith.constant 7.812500e-03 : f32
    %18 = vector.broadcast %cst_11 : f32 to vector<32x1xf32>
    %19 = arith.mulf %15, %18 : vector<32x1xf32>
    %20 = arith.mulf %17, %17 : vector<32x1xf32>
    %21 = arith.subf %19, %20 : vector<32x1xf32>
    %cst_12 = arith.constant 0.000000e+00 : f32
    %22 = vector.broadcast %cst_12 : f32 to vector<32x1xf32>
    %23 = arith.maximumf %21, %22 : vector<32x1xf32>
    %cst_13 = arith.constant 9.99999974E-6 : f32
    %24 = vector.broadcast %cst_13 : f32 to vector<32x1xf32>
    %25 = arith.addf %23, %24 : vector<32x1xf32>
    %26 = math.rsqrt %25 : vector<32x1xf32>
    %27 = vector.broadcast %17 : vector<32x1xf32> to vector<32x64xf32>
    %28 = arith.subf %1, %27 : vector<32x64xf32>
    %29 = vector.broadcast %26 : vector<32x1xf32> to vector<32x64xf32>
    %30 = arith.mulf %28, %29 : vector<32x64xf32>
    %31 = arith.truncf %30 : vector<32x64xf32> to vector<32x64xbf16>
    %32 = vector.broadcast %17 : vector<32x1xf32> to vector<32x64xf32>
    %33 = arith.subf %3, %32 : vector<32x64xf32>
    %34 = vector.broadcast %26 : vector<32x1xf32> to vector<32x64xf32>
    %35 = arith.mulf %33, %34 : vector<32x64xf32>
    %36 = arith.truncf %35 : vector<32x64xf32> to vector<32x64xbf16>
    %c0_14 = arith.constant 0 : index
    %c0_15 = arith.constant 0 : index
    %37 = vector.load %arg3[%c0_14, %c0_15] : memref<64x64xbf16, #tpu.memory_space<vmem>>, vector<64x64xbf16>
    %cst_16 = arith.constant dense<0.000000e+00> : vector<32x64xf32>
    %38 = tpu.matmul %31, %37, %cst_16 {dimension_numbers = #tpu.dot_dimension_numbers<[1], [0], [0], [1], [0, 0, 1, 1], [], []>} : vector<32x64xbf16>, vector<64x64xbf16>, vector<32x64xf32> -> vector<32x64xf32>
    %c0_17 = arith.constant 0 : index
    %c0_18 = arith.constant 0 : index
    %39 = vector.load %arg4[%c0_17, %c0_18] : memref<64x64xbf16, #tpu.memory_space<vmem>>, vector<64x64xbf16>
    %cst_19 = arith.constant dense<0.000000e+00> : vector<32x64xf32>
    %40 = tpu.matmul %36, %39, %cst_19 {dimension_numbers = #tpu.dot_dimension_numbers<[1], [0], [0], [1], [0, 0, 1, 1], [], []>} : vector<32x64xbf16>, vector<64x64xbf16>, vector<32x64xf32> -> vector<32x64xf32>
    %41 = arith.addf %38, %40 : vector<32x64xf32>
    %c0_20 = arith.constant 0 : index
    %c0_21 = arith.constant 0 : index
    %42 = vector.load %arg5[%c0_20, %c0_21] : memref<1x64xf32, #tpu.memory_space<vmem>>, vector<1x64xf32>
    %43 = vector.broadcast %42 : vector<1x64xf32> to vector<32x64xf32>
    %44 = arith.addf %41, %43 : vector<32x64xf32>
    %c0_22 = arith.constant 0 : index
    %c0_23 = arith.constant 0 : index
    %45 = vector.load %arg6[%c0_22, %c0_23] : memref<32x64xf32, #tpu.memory_space<vmem>>, vector<32x64xf32>
    tpu.vector_store %arg6[%c0_22, %c0_23], %44 {strides = array<i32>} : memref<32x64xf32, #tpu.memory_space<vmem>>, vector<32x64xf32>,
    return
  }
  func.func @transform_0(%arg0: i32) -> (i32, i32, i32, i32) {
    %c0_i32 = arith.constant 0 : i32
    %c0_i32_0 = arith.constant 0 : i32
    %c0_i32_1 = arith.constant 0 : i32
    %c0_i32_2 = arith.constant 0 : i32
    return %arg0, %c0_i32, %c0_i32_0, %c0_i32_1 : i32, i32, i32, i32
  }
  func.func @transform_1(%arg0: i32) -> (i32, i32, i32, i32) {
    %c1_i32 = arith.constant 1 : i32
    %c0_i32 = arith.constant 0 : i32
    %c0_i32_0 = arith.constant 0 : i32
    %c0_i32_1 = arith.constant 0 : i32
    return %arg0, %c1_i32, %c0_i32, %c0_i32_0 : i32, i32, i32, i32
  }
  func.func @transform_2(%arg0: i32) -> (i32, i32) {
    %c0_i32 = arith.constant 0 : i32
    %c0_i32_0 = arith.constant 0 : i32
    %c0_i32_1 = arith.constant 0 : i32
    return %c0_i32, %c0_i32_0 : i32, i32
  }
  func.func @transform_3(%arg0: i32) -> (i32, i32) {
    %c0_i32 = arith.constant 0 : i32
    %c0_i32_0 = arith.constant 0 : i32
    %c0_i32_1 = arith.constant 0 : i32
    return %c0_i32, %c0_i32_0 : i32, i32
  }
  func.func @transform_4(%arg0: i32) -> (i32, i32) {
    %c0_i32 = arith.constant 0 : i32
    %c0_i32_0 = arith.constant 0 : i32
    %c0_i32_1 = arith.constant 0 : i32
    return %c0_i32, %c0_i32_0 : i32, i32
  }
  func.func @transform_5(%arg0: i32) -> (i32, i32) {
    %c0_i32 = arith.constant 0 : i32
    %c0_i32_0 = arith.constant 0 : i32
    return %arg0, %c0_i32 : i32, i32
  }
}

</mosaic_0001>

<llo_original>
// kernel: tpu_custom_call.1
$region0: #{tpu_custom_call.1}
  #allocation0 [shape = 'u32[]', space=smem, size = 0x4, offset = 0x4, fixed_abs, tag = 'smem constant byte address 0x4 - core index']
  #allocation1 [shape = 'u32[144,128]{1,0:T(1,128)}', space=vmem, size = 0x12000, scoped, tag = 'internal scratch']
  %s0 = inlined_call_operand.hbm [shape: f32[16,2,8,64], index: 0, kind: input, shape index: {}]
  %s1 = inlined_call_operand.hbm [shape: f32[16,2,8,64], index: 1, kind: input, shape index: {}]
  %s2 = inlined_call_operand.hbm [shape: bf16[64,64], index: 2, kind: input, shape index: {}]
  %s3 = inlined_call_operand.hbm [shape: bf16[64,64], index: 3, kind: input, shape index: {}]
  %s4 = inlined_call_operand.vmem [shape: f32[1,64], index: 4, kind: input, shape index: {}]
  %s5 = inlined_call_operand.vmem [shape: f32[128,64], index: 5, kind: output, shape index: {}]
  %s6 = sld [smem:[#allocation0]]
  $region69: #{tpu_custom_call.1} parent=0
    _
  %s8 = ssub.s32 1, %s6
  %s9 = scalar_select 0, %s8, %s6
  $region1: #{tpu_custom_call.1} parent=0
    #allocation2 [shape = 'u8[32768]{0}', space=vmem, size = 0x8000, scoped, tag = 'input window, operand 0']
    #allocation3 [shape = 's32[2]{0}', space=sflag, size = 0x8, scoped, tag = 'scoped memory for tpu_custom_call.1']
    #allocation4 [shape = 'u8[32768]{0}', space=vmem, size = 0x8000, scoped, tag = 'input window, operand 1']
    #allocation5 [shape = 's32[2]{0}', space=sflag, size = 0x8, scoped, tag = 'scoped memory for tpu_custom_call.1']
    #allocation6 [shape = 'u8[16384]{0}', space=vmem, size = 0x4000, scoped, tag = 'input window, operand 2, single buffered']
    #allocation7 [shape = 'u8[16384]{0}', space=vmem, size = 0x4000, scoped, tag = 'input window, operand 3, single buffered']
    #allocation8 [shape = 's32[1]{0}', space=sflag, size = 0x4, scoped, tag = 'scoped memory for tpu_custom_call.1']
    %10 = vsyncpa [#allocation3], 0
    %s11 = scalar_lea.sflag [#allocation3], 1
    %12 = vsyncpa %s11, 0
    %13 = vsyncpa [#allocation5], 0
    %s14 = scalar_lea.sflag [#allocation5], 1
    %15 = vsyncpa %s14, 0
    %16 = vsyncpa [#allocation8], 0
    loop: start=0, step=1, limit=6
    $region2: #{tpu_custom_call.1} parent=1 // loop_pre_header
      _
    $region3: #{tpu_custom_call.1} parent=1 // loop_header
      %s18 = sphi 0, %s22
      %p19 = scmp.ge.s32.totalorder %s18, 6
      %s28 = sphi 0, %s30
      %s31 = sphi 0, %s28
      %s32 = sphi 0, %s31
      %s48 = sphi 0, %s32
      %s54 = sphi 0, %s56
      %s57 = sphi 0, %s54
      %s58 = sphi 0, %s57
      %s74 = sphi 0, %s58
      %s78 = sphi 0, %s78
      %s80 = sphi 0, %s78
      %s81 = sphi 0, %s80
      %s95 = sphi 0, %s81
      %s99 = sphi 0, %s99
      %s101 = sphi 0, %s99
      %s102 = sphi 0, %s101
      %s116 = sphi 0, %s102
      %s120 = sphi 0, %s120
      %s122 = sphi 0, %s120
      %s123 = sphi 0, %s122
      %s137 = sphi 0, %s123
      %s143 = sphi 0, %s145
      %s146 = sphi 0, %s143
      %s147 = sphi 0, %s146
      %s163 = sphi 0, %s147
    $region4: #{tpu_custom_call.1} parent=1 // loop_header_branch
      %21 = sbr.rel (%p19) target = $region8
    $region5: #{tpu_custom_call.1} parent=1 // loop_body
      %s23 = ssub.s32 %s18, 1
      %s24 = ssub.s32 %s18, 2
      %s25 = sadd.s32 %s18, 1
      %s26 = ssub.s32 %s18, %s25
      %p27 = scmp.eq.s32.totalorder %s26, 0
      %s29 = sadd.s32 %s28, 1
      %s30 = scalar_select %p27, %s28, %s29
      %p33 = pneg %p27
      %p34 = scmp.eq.s32.totalorder %s18, 3
      %p35 = por %p33, %p34
      %p36 = scmp.ne.s32.totalorder %s28, %s31
      %p37 = scmp.eq.s32.totalorder %s18, 0
      %p38 = por %p36, %p37
      %p39 = scmp.ne.s32.totalorder %s28, %s31
      %p40 = scmp.eq.s32.totalorder %s23, 3
      %p41 = por %p39, %p40
      %p42 = scmp.ne.s32.totalorder %s31, %s32
      %p43 = scmp.eq.s32.totalorder %s23, 0
      %p44 = por %p42, %p43
      %p45 = scmp.ne.s32.totalorder %s31, %s32
      %p46 = scmp.eq.s32.totalorder %s24, 3
      %p47 = por %p45, %p46
      %p49 = scmp.ne.s32.totalorder %s32, %s48
      %p50 = scmp.eq.s32.totalorder %s24, 0
      %p51 = por %p49, %p50
      %s52 = ssub.s32 %s18, %s25
      %p53 = scmp.eq.s32.totalorder %s52, 0
      %s55 = sadd.s32 %s54, 1
      %s56 = scalar_select %p53, %s54, %s55
      %p59 = pneg %p53
      %p60 = scmp.eq.s32.totalorder %s18, 3
      %p61 = por %p59, %p60
      %p62 = scmp.ne.s32.totalorder %s54, %s57
      %p63 = scmp.eq.s32.totalorder %s18, 0
      %p64 = por %p62, %p63
      %p65 = scmp.ne.s32.totalorder %s54, %s57
      %p66 = scmp.eq.s32.totalorder %s23, 3
      %p67 = por %p65, %p66
      %p68 = scmp.ne.s32.totalorder %s57, %s58
      %p69 = scmp.eq.s32.totalorder %s23, 0
      %p70 = por %p68, %p69
      %p71 = scmp.ne.s32.totalorder %s57, %s58
      %p72 = scmp.eq.s32.totalorder %s24, 3
      %p73 = por %p71, %p72
      %p75 = scmp.ne.s32.totalorder %s58, %s74
      %p76 = scmp.eq.s32.totalorder %s24, 0
      %p77 = por %p75, %p76
      %s79 = sadd.s32 %s78, 1
      %p82 = scmp.eq.s32.totalorder %s18, 3
      %p83 = scmp.ne.s32.totalorder %s78, %s80
      %p84 = scmp.eq.s32.totalorder %s18, 0
      %p85 = por %p83, %p84
      %p86 = scmp.ne.s32.totalorder %s78, %s80
      %p87 = scmp.eq.s32.totalorder %s23, 3
      %p88 = por %p86, %p87
      %p89 = scmp.ne.s32.totalorder %s80, %s81
      %p90 = scmp.eq.s32.totalorder %s23, 0
      %p91 = por %p89, %p90
      %p92 = scmp.ne.s32.totalorder %s80, %s81
      %p93 = scmp.eq.s32.totalorder %s24, 3
      %p94 = por %p92, %p93
      %p96 = scmp.ne.s32.totalorder %s81, %s95
      %p97 = scmp.eq.s32.totalorder %s24, 0
      %p98 = por %p96, %p97
      %s100 = sadd.s32 %s99, 1
      %p103 = scmp.eq.s32.totalorder %s18, 3
      %p104 = scmp.ne.s32.totalorder %s99, %s101
      %p105 = scmp.eq.s32.totalorder %s18, 0
      %p106 = por %p104, %p105
      %p107 = scmp.ne.s32.totalorder %s99, %s101
      %p108 = scmp.eq.s32.totalorder %s23, 3
      %p109 = por %p107, %p108
      %p110 = scmp.ne.s32.totalorder %s101, %s102
      %p111 = scmp.eq.s32.totalorder %s23, 0
      %p112 = por %p110, %p111
      %p113 = scmp.ne.s32.totalorder %s101, %s102
      %p114 = scmp.eq.s32.totalorder %s24, 3
      %p115 = por %p113, %p114
      %p117 = scmp.ne.s32.totalorder %s102, %s116
      %p118 = scmp.eq.s32.totalorder %s24, 0
      %p119 = por %p117, %p118
      %s121 = sadd.s32 %s120, 1
      %p124 = scmp.eq.s32.totalorder %s18, 3
      %p125 = scmp.ne.s32.totalorder %s120, %s122
      %p126 = scmp.eq.s32.totalorder %s18, 0
      %p127 = por %p125, %p126
      %p128 = scmp.ne.s32.totalorder %s120, %s122
      %p129 = scmp.eq.s32.totalorder %s23, 3
      %p130 = por %p128, %p129
      %p131 = scmp.ne.s32.totalorder %s122, %s123
      %p132 = scmp.eq.s32.totalorder %s23, 0
      %p133 = por %p131, %p132
      %p134 = scmp.ne.s32.totalorder %s122, %s123
      %p135 = scmp.eq.s32.totalorder %s24, 3
      %p136 = por %p134, %p135
      %p138 = scmp.ne.s32.totalorder %s123, %s137
      %p139 = scmp.eq.s32.totalorder %s24, 0
      %p140 = por %p138, %p139
      %s141 = ssub.s32 %s18, %s25
      %p142 = scmp.eq.s32.totalorder %s141, 0
      %s144 = sadd.s32 %s143, 1
      %s145 = scalar_select %p142, %s143, %s144
      %p148 = pneg %p142
      %p149 = scmp.eq.s32.totalorder %s18, 3
      %p150 = por %p148, %p149
      %p151 = scmp.ne.s32.totalorder %s143, %s146
      %p152 = scmp.eq.s32.totalorder %s18, 0
      %p153 = por %p151, %p152
      %p154 = scmp.ne.s32.totalorder %s143, %s146
      %p155 = scmp.eq.s32.totalorder %s23, 3
      %p156 = por %p154, %p155
      %p157 = scmp.ne.s32.totalorder %s146, %s147
      %p158 = scmp.eq.s32.totalorder %s23, 0
      %p159 = por %p157, %p158
      %p160 = scmp.ne.s32.totalorder %s146, %s147
      %p161 = scmp.eq.s32.totalorder %s24, 3
      %p162 = por %p160, %p161
      %p164 = scmp.ne.s32.totalorder %s147, %s163
      %p165 = scmp.eq.s32.totalorder %s24, 0
      %p166 = por %p164, %p165
      %p167 = scmp.le.s32.totalorder 1, %s18
      %p168 = scmp.lt.s32.totalorder %s18, 5
      %p169 = pnand %p167, %p168
      %p170 = pneg %p169
      // Predicated region
      $region9: #{tpu_custom_call.1} parent=5 // pred_check
        _
      $region10: #{tpu_custom_call.1} parent=5 // pred_check_branch
        %172 = sbr.rel (%p169) target = $region12
      $region11: #{tpu_custom_call.1} parent=5 // pred_region
        %s173 = ssub.s32 %s18, 1
        // Predicated region
        $region13: #{tpu_custom_call.1} parent=11 // pred_check
          %p174 = pneg %p91
        $region14: #{tpu_custom_call.1} parent=11 // pred_check_branch
          %176 = sbr.rel (%p174) target = $region16
        $region15: #{tpu_custom_call.1} parent=11 // pred_region
          %s178 = ssub.s32 512, 512
          %179 = vsyncadd [#allocation5], %s178
          %s180 = sshll.u32 [#allocation6], 4
          %s181 = int_to_ptr.vmem [resolvable:$true] %s180
          %186 = dma.hbm_to_vmem [thread:$0]  %s2, 512, %s181, [#allocation5], 64, 64, 4
        $region16: #{tpu_custom_call.1} parent=11 // pred_fallthru
          _
        // Predicated region
        $region17: #{tpu_custom_call.1} parent=11 // pred_check
          %p187 = pneg %p112
        $region18: #{tpu_custom_call.1} parent=11 // pred_check_branch
          %189 = sbr.rel (%p187) target = $region20
        $region19: #{tpu_custom_call.1} parent=11 // pred_region
          %s191 = ssub.s32 512, 512
          %192 = vsyncadd [#allocation8], %s191
          %s193 = sshll.u32 [#allocation7], 4
          %s194 = int_to_ptr.vmem [resolvable:$true] %s193
          %199 = dma.hbm_to_vmem [thread:$0]  %s3, 512, %s194, [#allocation8], 64, 64, 4
        $region20: #{tpu_custom_call.1} parent=11 // pred_fallthru
          _
        // Predicated region
        $region21: #{tpu_custom_call.1} parent=11 // pred_check
          %p200 = pneg %p133
        $region22: #{tpu_custom_call.1} parent=11 // pred_check_branch
          %202 = sbr.rel (%p200) target = $region24
        $region23: #{tpu_custom_call.1} parent=11 // pred_region
          _
        $region24: #{tpu_custom_call.1} parent=11 // pred_fallthru
          _
      $region12: #{tpu_custom_call.1} parent=5 // pred_fallthru
        _
      %p203 = scmp.lt.s32.totalorder %s18, 4
      // Predicated region
      $region25: #{tpu_custom_call.1} parent=5 // pred_check
        %p204 = pneg %p203
      $region26: #{tpu_custom_call.1} parent=5 // pred_check_branch
        %206 = sbr.rel (%p204) target = $region28
      $region27: #{tpu_custom_call.1} parent=5 // pred_region
        // Predicated region
        $region29: #{tpu_custom_call.1} parent=27 // pred_check
          %p207 = pneg %p38
        $region30: #{tpu_custom_call.1} parent=27 // pred_check_branch
          %209 = sbr.rel (%p207) target = $region32
        $region31: #{tpu_custom_call.1} parent=27 // pred_region
          %s210 = sand.u32 %s28, 1
          %s211 = scalar_lea.sflag [#allocation3], %s210
          %s212 = sand.u32 %s28, 1
          %s213 = smul.addr %s212, 32
          %s214 = scalar_lea.vmem [#allocation2], %s213
          %s215 = smul.u32 4, %s18
          %s217 = ssub.s32 512, 512
          %218 = vsyncadd %s211, %s217
          %s219 = smul.addr %s215, 2
          %s220 = smul.addr %s219, 128
          %s221 = scalar_lea.hbm %s0, %s220
          %s222 = sshll.u32 %s214, 4
          %s223 = int_to_ptr.vmem [resolvable:$true] %s222
          %228 = dma.hbm_to_vmem [thread:$0]  %s221, 512, %s223, %s211, 256, 128, 8
        $region32: #{tpu_custom_call.1} parent=27 // pred_fallthru
          _
        // Predicated region
        $region33: #{tpu_custom_call.1} parent=27 // pred_check
          %p229 = pneg %p64
        $region34: #{tpu_custom_call.1} parent=27 // pred_check_branch
          %231 = sbr.rel (%p229) target = $region36
        $region35: #{tpu_custom_call.1} parent=27 // pred_region
          %s232 = sand.u32 %s18, 1
          %s233 = scalar_lea.sflag [#allocation5], %s232
          %s234 = sand.u32 %s54, 1
          %s235 = smul.addr %s234, 32
          %s236 = scalar_lea.vmem [#allocation4], %s235
          %s237 = smul.u32 4, %s18
          %s239 = ssub.s32 512, 512
          %240 = vsyncadd %s233, %s239
          %s241 = smul.addr %s237, 2
          %s242 = sadd.s32 1, %s241
          %s243 = smul.addr %s242, 128
          %s244 = scalar_lea.hbm %s1, %s243
          %s245 = sshll.u32 %s236, 4
          %s246 = int_to_ptr.vmem [resolvable:$true] %s245
          %251 = dma.hbm_to_vmem [thread:$0]  %s244, 512, %s246, %s233, 256, 128, 8
        $region36: #{tpu_custom_call.1} parent=27 // pred_fallthru
          _
      $region28: #{tpu_custom_call.1} parent=5 // pred_fallthru
        _
      %p252 = scmp.le.s32.totalorder 1, %s18
      %p253 = scmp.lt.s32.totalorder %s18, 5
      %p254 = pnand %p252, %p253
      %p255 = pneg %p254
      // Predicated region
      $region37: #{tpu_custom_call.1} parent=5 // pred_check
        _
      $region38: #{tpu_custom_call.1} parent=5 // pred_check_branch
        %257 = sbr.rel (%p254) target = $region40
      $region39: #{tpu_custom_call.1} parent=5 // pred_region
        %s258 = ssub.s32 %s18, 1
        %s259 = sand.u32 %s31, 1
        %s260 = scalar_lea.sflag [#allocation3], %s259
        %s261 = sand.u32 %s31, 1
        %s262 = smul.addr %s261, 32
        %s263 = scalar_lea.vmem [#allocation2], %s262
        // Predicated region
        $region41: #{tpu_custom_call.1} parent=39 // pred_check
          %p264 = pneg %p44
        $region42: #{tpu_custom_call.1} parent=39 // pred_check_branch
          %266 = sbr.rel (%p264) target = $region44
        $region43: #{tpu_custom_call.1} parent=39 // pred_region
          %267 = dma.done %s260, 512
        $region44: #{tpu_custom_call.1} parent=39 // pred_fallthru
          _
        %s268 = sand.u32 %s23, 1
        %s269 = scalar_lea.sflag [#allocation5], %s268
        %s270 = sand.u32 %s57, 1
        %s271 = smul.addr %s270, 32
        %s272 = scalar_lea.vmem [#allocation4], %s271
        // Predicated region
        $region45: #{tpu_custom_call.1} parent=39 // pred_check
          %p273 = pneg %p70
        $region46: #{tpu_custom_call.1} parent=39 // pred_check_branch
          %275 = sbr.rel (%p273) target = $region48
        $region47: #{tpu_custom_call.1} parent=39 // pred_region
          %276 = dma.done %s269, 512
        $region48: #{tpu_custom_call.1} parent=39 // pred_fallthru
          _
        // Predicated region
        $region49: #{tpu_custom_call.1} parent=39 // pred_check
          %p277 = pneg %p91
        $region50: #{tpu_custom_call.1} parent=39 // pred_check_branch
          %279 = sbr.rel (%p277) target = $region52
        $region51: #{tpu_custom_call.1} parent=39 // pred_region
          %280 = dma.done [#allocation5], 512
        $region52: #{tpu_custom_call.1} parent=39 // pred_fallthru
          _
        // Predicated region
        $region53: #{tpu_custom_call.1} parent=39 // pred_check
          %p281 = pneg %p112
        $region54: #{tpu_custom_call.1} parent=39 // pred_check_branch
          %283 = sbr.rel (%p281) target = $region56
        $region55: #{tpu_custom_call.1} parent=39 // pred_region
          %284 = dma.done [#allocation8], 512
        $region56: #{tpu_custom_call.1} parent=39 // pred_fallthru
          _
        %s285 = sand.u32 %s31, 1
        %s286 = scalar_lea.sflag [#allocation3], %s285
        %s287 = sand.u32 %s31, 1
        %s288 = smul.addr %s287, 32
        %s289 = scalar_lea.vmem [#allocation2], %s288
        %p290 = pneg %p44
        %p291 = pneg %p41
        %s292 = sand.u32 %s23, 1
        %s293 = scalar_lea.sflag [#allocation5], %s292
        %s294 = sand.u32 %s57, 1
        %s295 = smul.addr %s294, 32
        %s296 = scalar_lea.vmem [#allocation4], %s295
        %p297 = pneg %p70
        %p298 = pneg %p67
        %p299 = pneg %p91
        %p300 = pneg %p88
        %p301 = pneg %p112
        %p302 = pneg %p109
        %p303 = pneg %p133
        %p304 = pneg %p130
        %p305 = pneg %p159
        %p306 = pneg %p156
        %s307 = smul.u32 4, %s23
        %p308 = scmp.lt.s32.totalorder %s307, 15
        %s309 = scalar_select %p308, %s307, 15
        %s310 = smul.addr %s309, 8
        %s311 = scalar_lea.vmem %s5, %s310
        %s312 = smul.u32 4, %s23
        %s313 = smul.u32 4, %s23
        %s314 = smul.u32 4, %s23
        %p315 = scmp.lt.s32.totalorder %s314, 15
        %s316 = scalar_select %p315, %s314, 15
        %s317 = smul.addr %s316, 8
        %s318 = scalar_lea.vmem %s5, %s317
        %s319 = smul.u32 4, %s23
        %v321 = vld [vmem:[%s263] sm:$0xff]
        %v322 = vld [vmem:[%s263 + $0x8] sm:$0xff]
        %v323 = vld [vmem:[%s263 + $0x10] sm:$0xff]
        %v324 = vld [vmem:[%s263 + $0x18] sm:$0xff]
        %v325 = vld [vmem:[%s272] sm:$0xff]
        %v326 = vld [vmem:[%s272 + $0x8] sm:$0xff]
        %v327 = vld [vmem:[%s272 + $0x10] sm:$0xff]
        %v328 = vld [vmem:[%s272 + $0x18] sm:$0xff]
        %vm329 = vcmask 523264
        %v330 = vsel %vm329, %v321, 0.0
        %331 = vadd.xlane.f32.xlu0 %v330
        %v332 = vpop.xlane.xlu0 %331
        %v333 = vsel %vm329, %v322, 0.0
        %334 = vadd.xlane.f32.xlu0 %v333
        %v335 = vpop.xlane.xlu0 %334
        %v336 = vsel %vm329, %v323, 0.0
        %337 = vadd.xlane.f32.xlu0 %v336
        %v338 = vpop.xlane.xlu0 %337
        %v339 = vsel %vm329, %v324, 0.0
        %340 = vadd.xlane.f32.xlu0 %v339
        %v341 = vpop.xlane.xlu0 %340
        %v342 = vsel %vm329, %v325, 0.0
        %343 = vadd.xlane.f32.xlu0 %v342
        %v344 = vpop.xlane.xlu0 %343
        %v345 = vsel %vm329, %v326, 0.0
        %346 = vadd.xlane.f32.xlu0 %v345
        %v347 = vpop.xlane.xlu0 %346
        %v348 = vsel %vm329, %v327, 0.0
        %349 = vadd.xlane.f32.xlu0 %v348
        %v350 = vpop.xlane.xlu0 %349
        %v351 = vsel %vm329, %v328, 0.0
        %352 = vadd.xlane.f32.xlu0 %v351
        %v353 = vpop.xlane.xlu0 %352
        %v354 = vadd.f32 %v332, %v344
        %v355 = vadd.f32 %v335, %v347
        %v356 = vadd.f32 %v338, %v350
        %v357 = vadd.f32 %v341, %v353
        %v358 = vmul.f32 %v321, %v321
        %v359 = vmul.f32 %v322, %v322
        %v360 = vmul.f32 %v323, %v323
        %v361 = vmul.f32 %v324, %v324
        %v362 = vsel %vm329, %v358, 0.0
        %363 = vadd.xlane.f32.xlu0 %v362
        %v364 = vpop.xlane.xlu0 %363
        %v365 = vsel %vm329, %v359, 0.0
        %366 = vadd.xlane.f32.xlu0 %v365
        %v367 = vpop.xlane.xlu0 %366
        %v368 = vsel %vm329, %v360, 0.0
        %369 = vadd.xlane.f32.xlu0 %v368
        %v370 = vpop.xlane.xlu0 %369
        %v371 = vsel %vm329, %v361, 0.0
        %372 = vadd.xlane.f32.xlu0 %v371
        %v373 = vpop.xlane.xlu0 %372
        %v374 = vmul.f32 %v325, %v325
        %v375 = vmul.f32 %v326, %v326
        %v376 = vmul.f32 %v327, %v327
        %v377 = vmul.f32 %v328, %v328
        %v378 = vsel %vm329, %v374, 0.0
        %379 = vadd.xlane.f32.xlu0 %v378
        %v380 = vpop.xlane.xlu0 %379
        %v381 = vsel %vm329, %v375, 0.0
        %382 = vadd.xlane.f32.xlu0 %v381
        %v383 = vpop.xlane.xlu0 %382
        %v384 = vsel %vm329, %v376, 0.0
        %385 = vadd.xlane.f32.xlu0 %v384
        %v386 = vpop.xlane.xlu0 %385
        %v387 = vsel %vm329, %v377, 0.0
        %388 = vadd.xlane.f32.xlu0 %v387
        %v389 = vpop.xlane.xlu0 %388
        %v390 = vadd.f32 %v364, %v380
        %v391 = vadd.f32 %v367, %v383
        %v392 = vadd.f32 %v370, %v386
        %v393 = vadd.f32 %v373, %v389
        %v394 = vmul.f32 %v354, 0.0078125
        %v395 = vmul.f32 %v355, 0.0078125
        %v396 = vmul.f32 %v356, 0.0078125
        %v397 = vmul.f32 %v357, 0.0078125
        %v398 = vmul.f32 %v390, 0.0078125
        %v399 = vmul.f32 %v391, 0.0078125
        %v400 = vmul.f32 %v392, 0.0078125
        %v401 = vmul.f32 %v393, 0.0078125
        %v402 = vmul.f32 %v394, %v394
        %v403 = vmul.f32 %v395, %v395
        %v404 = vmul.f32 %v396, %v396
        %v405 = vmul.f32 %v397, %v397
        %v406 = vsub.f32 %v398, %v402
        %v407 = vsub.f32 %v399, %v403
        %v408 = vsub.f32 %v400, %v404
        %v409 = vsub.f32 %v401, %v405
        %v410 = vmax.f32 %v406, 0.0
        %v411 = vmax.f32 %v407, 0.0
        %v412 = vmax.f32 %v408, 0.0
        %v413 = vmax.f32 %v409, 0.0
        %v414 = vadd.f32 %v410, 1e-05
        %v415 = vadd.f32 %v411, 1e-05
        %v416 = vadd.f32 %v412, 1e-05
        %v417 = vadd.f32 %v413, 1e-05
        %v418 = vrsqrt.pop %v414
        %v419 = vrsqrt.pop %v415
        %v420 = vrsqrt.pop %v416
        %v421 = vrsqrt.pop %v417
        %v422 = vsub.f32 %v321, %v394
        %v423 = vsub.f32 %v322, %v395
        %v424 = vsub.f32 %v323, %v396
        %v425 = vsub.f32 %v324, %v397
        %v426 = vmul.f32 %v422, %v418
        %v427 = vmul.f32 %v423, %v419
        %v428 = vmul.f32 %v424, %v420
        %v429 = vmul.f32 %v425, %v421
        %v430 = vpack.c.bf16 %v427, %v426
        %v431 = vpack.c.bf16 %v429, %v428
        %v432 = vsub.f32 %v325, %v394
        %v433 = vsub.f32 %v326, %v395
        %v434 = vsub.f32 %v327, %v396
        %v435 = vsub.f32 %v328, %v397
        %v436 = vmul.f32 %v432, %v418
        %v437 = vmul.f32 %v433, %v419
        %v438 = vmul.f32 %v434, %v420
        %v439 = vmul.f32 %v435, %v421
        %v440 = vpack.c.bf16 %v437, %v436
        %v441 = vpack.c.bf16 %v439, %v438
        %v442 = vld [vmem:[#allocation6] sm:$0xf]
        %v443 = vld [vmem:[#allocation6 + $0x4] sm:$0xf]
        %v444 = vld [vmem:[#allocation6 + $0x8] sm:$0xf]
        %v445 = vld [vmem:[#allocation6 + $0xc] sm:$0xf]
        %v446 = vld [vmem:[#allocation6 + $0x10] sm:$0xf]
        %v447 = vld [vmem:[#allocation6 + $0x14] sm:$0xf]
        %v448 = vld [vmem:[#allocation6 + $0x18] sm:$0xf]
        %v449 = vld [vmem:[#allocation6 + $0x1c] sm:$0xf]
        %v450 = vld [vmem:[#allocation7] sm:$0xf]
        %v451 = vld [vmem:[#allocation7 + $0x4] sm:$0xf]
        %v452 = vld [vmem:[#allocation7 + $0x8] sm:$0xf]
        %v453 = vld [vmem:[#allocation7 + $0xc] sm:$0xf]
        %v454 = vld [vmem:[#allocation7 + $0x10] sm:$0xf]
        %v455 = vld [vmem:[#allocation7 + $0x14] sm:$0xf]
        %v456 = vld [vmem:[#allocation7 + $0x18] sm:$0xf]
        %v457 = vld [vmem:[#allocation7 + $0x1c] sm:$0xf]
        %v466 = vunpack.c.l.b16 %v450
        %v467 = vunpack.c.l.b16 %v451
        %v468 = vunpack.c.l.b16 %v452
        %v469 = vunpack.c.l.b16 %v453
        %v470 = vunpack.c.l.b16 %v454
        %v471 = vunpack.c.l.b16 %v455
        %v472 = vunpack.c.l.b16 %v456
        %v473 = vunpack.c.l.b16 %v457
        %v474 = vpack.c.b16 %v467, %v466
        %v475 = vpack.c.b16 %v469, %v468
        %v476 = vpack.c.b16 %v471, %v470
        %v477 = vpack.c.b16 %v473, %v472
        %v483 = vsel %vm329, %v440, 0
        %v486 = vsel %vm329, %v441, 0
        %488 = vmatprep.subr.bf16.mxu0 0
        %489 = vmatpush1.bf16.msra.mxu0 %v474
        %490 = vmatprep.subr.bf16.mxu0 0
        %491 = vmatpush1.bf16.msra.mxu0 %v475
        %492 = vmatprep.subr.bf16.mxu0 0
        %493 = vmatpush1.bf16.msra.mxu0 %v476
        %494 = vmatprep.subr.bf16.mxu0 0
        %495 = vmatpush1.bf16.msra.mxu0 %v477
        %496 = vmatprep.subr.bf16.mxu0 0
        %497 = vmatpush1.bf16.msra.mxu0 0
        %498 = vmatprep.subr.bf16.mxu0 0
        %499 = vmatpush1.bf16.msra.mxu0 0
        %500 = vmatprep.subr.bf16.mxu0 0
        %501 = vmatpush1.bf16.msra.mxu0 0
        %502 = vmatprep.subr.bf16.mxu0 0
        %503 = vmatpush1.bf16.msra.mxu0 0
        %504 = vmatprep.subr.bf16.mxu0 0
        %505 = vmatpush1.bf16.msra.mxu0 0
        %506 = vmatprep.subr.bf16.mxu0 0
        %507 = vmatpush1.bf16.msra.mxu0 0
        %508 = vmatprep.subr.bf16.mxu0 0
        %509 = vmatpush1.bf16.msra.mxu0 0
        %510 = vmatprep.subr.bf16.mxu0 0
        %511 = vmatpush1.bf16.msra.mxu0 0
        %512 = vmatprep.subr.bf16.mxu0 0
        %513 = vmatpush1.bf16.msra.mxu0 0
        %514 = vmatprep.subr.bf16.mxu0 0
        %515 = vmatpush1.bf16.msra.mxu0 0
        %516 = vmatprep.subr.bf16.mxu0 0
        %517 = vmatpush1.bf16.msra.mxu0 0
        %518 = vmatprep.subr.bf16.mxu0 0
        %519 = vmatpush1.bf16.msra.mxu0 0
        %520 = vmatprep.mubr.bf16.mxu0 0
        %521 = vmatmul.mubr.bf16.gmra.mrb[0].mxu0 %v483
        %v522 = vpop.f32.mrb[0].mxu0
        %v523 = vadd.f32 0.0, %v522
        %v524 = vpop.f32.mrb[0].mxu0
        %v525 = vpop.f32.mrb[0].mxu0
        %v526 = vadd.f32 0.0, %v525
        %v527 = vpop.f32.mrb[0].mxu0
        %528 = vmatprep.mubr.bf16.mxu0 0
        %529 = vmatmul.mubr.bf16.gmra.mrb[0].mxu0 %v486
        %v530 = vpop.f32.mrb[0].mxu0
        %v531 = vadd.f32 0.0, %v530
        %v532 = vpop.f32.mrb[0].mxu0
        %v533 = vpop.f32.mrb[0].mxu0
        %v534 = vadd.f32 0.0, %v533
        %v535 = vpop.f32.mrb[0].mxu0
        %536 = vdwg.mxu0
        %v545 = vunpack.c.l.b16 %v442
        %v546 = vunpack.c.l.b16 %v443
        %v547 = vunpack.c.l.b16 %v444
        %v548 = vunpack.c.l.b16 %v445
        %v549 = vunpack.c.l.b16 %v446
        %v550 = vunpack.c.l.b16 %v447
        %v551 = vunpack.c.l.b16 %v448
        %v552 = vunpack.c.l.b16 %v449
        %v553 = vpack.c.b16 %v546, %v545
        %v554 = vpack.c.b16 %v548, %v547
        %v555 = vpack.c.b16 %v550, %v549
        %v556 = vpack.c.b16 %v552, %v551
        %v562 = vsel %vm329, %v430, 0
        %v565 = vsel %vm329, %v431, 0
        %567 = vmatprep.subr.bf16.mxu0 0
        %568 = vmatpush1.bf16.msra.mxu0 %v553
        %569 = vmatprep.subr.bf16.mxu0 0
        %570 = vmatpush1.bf16.msra.mxu0 %v554
        %571 = vmatprep.subr.bf16.mxu0 0
        %572 = vmatpush1.bf16.msra.mxu0 %v555
        %573 = vmatprep.subr.bf16.mxu0 0
        %574 = vmatpush1.bf16.msra.mxu0 %v556
        %575 = vmatprep.subr.bf16.mxu0 0
        %576 = vmatpush1.bf16.msra.mxu0 0
        %577 = vmatprep.subr.bf16.mxu0 0
        %578 = vmatpush1.bf16.msra.mxu0 0
        %579 = vmatprep.subr.bf16.mxu0 0
        %580 = vmatpush1.bf16.msra.mxu0 0
        %581 = vmatprep.subr.bf16.mxu0 0
        %582 = vmatpush1.bf16.msra.mxu0 0
        %583 = vmatprep.subr.bf16.mxu0 0
        %584 = vmatpush1.bf16.msra.mxu0 0
        %585 = vmatprep.subr.bf16.mxu0 0
        %586 = vmatpush1.bf16.msra.mxu0 0
        %587 = vmatprep.subr.bf16.mxu0 0
        %588 = vmatpush1.bf16.msra.mxu0 0
        %589 = vmatprep.subr.bf16.mxu0 0
        %590 = vmatpush1.bf16.msra.mxu0 0
        %591 = vmatprep.subr.bf16.mxu0 0
        %592 = vmatpush1.bf16.msra.mxu0 0
        %593 = vmatprep.subr.bf16.mxu0 0
        %594 = vmatpush1.bf16.msra.mxu0 0
        %595 = vmatprep.subr.bf16.mxu0 0
        %596 = vmatpush1.bf16.msra.mxu0 0
        %597 = vmatprep.subr.bf16.mxu0 0
        %598 = vmatpush1.bf16.msra.mxu0 0
        %599 = vmatprep.mubr.bf16.mxu0 0
        %600 = vmatmul.mubr.bf16.gmra.mrb[0].mxu0 %v562
        %v601 = vpop.f32.mrb[0].mxu0
        %v602 = vadd.f32 %v523, %v601
        %v603 = vpop.f32.mrb[0].mxu0
        %v604 = vpop.f32.mrb[0].mxu0
        %v605 = vadd.f32 %v526, %v604
        %v606 = vpop.f32.mrb[0].mxu0
        %607 = vmatprep.mubr.bf16.mxu0 0
        %608 = vmatmul.mubr.bf16.gmra.mrb[0].mxu0 %v565
        %v609 = vpop.f32.mrb[0].mxu0
        %v610 = vadd.f32 %v531, %v609
        %v611 = vpop.f32.mrb[0].mxu0
        %v612 = vpop.f32.mrb[0].mxu0
        %v613 = vadd.f32 %v534, %v612
        %v614 = vpop.f32.mrb[0].mxu0
        %615 = vdwg.mxu0
        %v616 = vld [vmem:[%s4] sm:$0x1]
        %v618 = vlaneseq
        %v619 = vshrl.u32 %v618, 7
        %v620 = vsub.s32 0, %v619
        %v621 = vrot.slane %v616, %v620
        %v623 = vadd.f32 %v602, %v621
        %v624 = vadd.f32 %v605, %v621
        %v625 = vadd.f32 %v610, %v621
        %v626 = vadd.f32 %v613, %v621
        %627 = vst.msk [vmem:[%s318] sm:$0xff] %vm329, %v623
        %628 = vst.msk [vmem:[%s318 + $0x8] sm:$0xff] %vm329, %v624
        %629 = vst.msk [vmem:[%s318 + $0x10] sm:$0xff] %vm329, %v625
        %630 = vst.msk [vmem:[%s318 + $0x18] sm:$0xff] %vm329, %v626
        %s631 = smul.u32 4, %s23
        %p632 = scmp.lt.s32.totalorder %s631, 15
        %s633 = scalar_select %p632, %s631, 15
        %s634 = smul.addr %s633, 8
        %s635 = scalar_lea.vmem %s5, %s634
        // Predicated region
        $region57: #{tpu_custom_call.1} parent=39 // pred_check
          %p636 = pneg %p156
        $region58: #{tpu_custom_call.1} parent=39 // pred_check_branch
          %638 = sbr.rel (%p636) target = $region60
        $region59: #{tpu_custom_call.1} parent=39 // pred_region
          %s639 = smul.u32 4, %s23
        $region60: #{tpu_custom_call.1} parent=39 // pred_fallthru
          _
      $region40: #{tpu_custom_call.1} parent=5 // pred_fallthru
        _
      %p640 = scmp.le.s32.totalorder 2, %s18
      // Predicated region
      $region61: #{tpu_custom_call.1} parent=5 // pred_check
        %p641 = pneg %p640
      $region62: #{tpu_custom_call.1} parent=5 // pred_check_branch
        %643 = sbr.rel (%p641) target = $region64
      $region63: #{tpu_custom_call.1} parent=5 // pred_region
        %s644 = ssub.s32 %s18, 2
        // Predicated region
        $region65: #{tpu_custom_call.1} parent=63 // pred_check
          %p645 = pneg %p162
        $region66: #{tpu_custom_call.1} parent=63 // pred_check_branch
          %647 = sbr.rel (%p645) target = $region68
        $region67: #{tpu_custom_call.1} parent=63 // pred_region
          %s648 = smul.u32 4, %s24
          %p649 = scmp.lt.s32.totalorder %s648, 15
          %s650 = scalar_select %p649, %s648, 15
          %s651 = smul.addr %s650, 8
          %s652 = scalar_lea.vmem %s5, %s651
        $region68: #{tpu_custom_call.1} parent=63 // pred_fallthru
          _
      $region64: #{tpu_custom_call.1} parent=5 // pred_fallthru
        _
    $region6: #{tpu_custom_call.1} parent=1 // loop_footer
      %s22 = sadd.s32 1, %s18
    $region7: #{tpu_custom_call.1} parent=1 // loop_footer_branch
      %17 = sbr.rel target = $region3
    $region8: #{tpu_custom_call.1} parent=1 // loop_exit
      _
    %653 = vsyncpa [#allocation3], 1
    %s654 = scalar_lea.sflag [#allocation3], 1
    %655 = vsyncpa %s654, 1
    %656 = vsyncpa [#allocation5], 1
    %s657 = scalar_lea.sflag [#allocation5], 1
    %658 = vsyncpa %s657, 1
    %659 = vsyncpa [#allocation8], 1

</llo_original>
